<compile_context>
chip_gen: v7x
topology: tpu7x:2x2x1
jax: 0.10.0
libtpu: 0.0.40
codegen_flags: <defaults>
</compile_context>

<pallas_src>
import jax
import jax.numpy as jnp
from jax.experimental import pallas as pl
from jax.experimental.pallas import tpu as pltpu

_ROWS_PER_STEP = 8  # one full (8, 128*k) output tile per grid step


# ----------------------------- Pallas kernel ------------------------------ #
def _gather_rows_kernel(labels_sref, table_hbm, out_ref, rows_vmem, sems):
    """Gather _ROWS_PER_STEP embedding rows for one (8, H) output tile.

    labels_sref: (B_pad,) int32 in SMEM (scalar prefetch)
    table_hbm  : (V, H) raw HBM ref (memory_space=pl.ANY, manual DMA)
    out_ref    : (8, H) output block in VMEM
    rows_vmem  : (8, H) VMEM scratch the row DMAs land in
    sems       : (8,) DMA semaphores
    """
    base = pl.program_id(0) * _ROWS_PER_STEP

    # Issue all row DMAs up front so they are in flight simultaneously.
    for r in range(_ROWS_PER_STEP):
        lbl = labels_sref[base + r]
        pltpu.make_async_copy(table_hbm.at[lbl], rows_vmem.at[r], sems.at[r]).start()

    for r in range(_ROWS_PER_STEP):
        lbl = labels_sref[base + r]
        pltpu.make_async_copy(table_hbm.at[lbl], rows_vmem.at[r], sems.at[r]).wait()

    # Single full-tile (unmasked) store of the whole (8, H) block.
    out_ref[...] = rows_vmem[...]


@jax.jit
def label_embed_pallas(labels, table):
    """labels: (B,) int, table: (V, H) -> (B, H) in table.dtype."""
    b = labels.shape[0]
    v, h = table.shape
    r = _ROWS_PER_STEP
    b_pad = pl.cdiv(b, r) * r

    # Clamp to a valid row: TPU DMA gathers have no runtime bounds check, so an
    # out-of-range label must never become an OOB read.
    # TODO(synk): when dropout_prob == 0 but force_drop_ids requests a drop,
    # the label num_classes is clamped to num_classes-1 here (PyTorch's
    # nn.Embedding would raise instead of returning a wrong-but-valid row).
    labels_i32 = jnp.clip(labels.astype(jnp.int32), 0, v - 1)
    # Pad the batch to a multiple of 8 with a valid index (row 0); padded rows
    # are sliced off below.
    labels_pad = jnp.pad(labels_i32, (0, b_pad - b))

    dtype_bytes = jnp.dtype(table.dtype).itemsize
    cost = pl.CostEstimate(
        flops=0,
        transcendentals=0,
        bytes_accessed=2 * b_pad * h * dtype_bytes,  # read rows + write output
    )

    grid_spec = pltpu.PrefetchScalarGridSpec(
        num_scalar_prefetch=1,                 # labels land in SMEM first
        grid=(b_pad // r,),
        in_specs=[
            pl.BlockSpec(memory_space=pl.ANY),  # table stays in HBM, manual DMA
        ],
        out_specs=pl.BlockSpec((r, h), lambda i, lbl: (i, 0)),
        scratch_shapes=[
            pltpu.VMEM((r, h), table.dtype),
            pltpu.SemaphoreType.DMA((r,)),
        ],
    )

    out = pl.pallas_call(
        _gather_rows_kernel,
        out_shape=jax.ShapeDtypeStruct((b_pad, h), table.dtype),
        grid_spec=grid_spec,
        compiler_params=pltpu.CompilerParams(
            # Grid steps are independent -> megacore (v7x) can split them.
            dimension_semantics=("parallel",),
        ),
        cost_estimate=cost,
    )(labels_pad, table)
    return out[:b]


# --------------------------- Module equivalent ----------------------------- #
class LabelEmbedder:
    """JAX/Pallas port of the PyTorch LabelEmbedder."""

    def __init__(self, num_classes, hidden_size, dropout_prob, key):
        use_cfg_embedding = int(dropout_prob > 0)
        # nn.Embedding default init ~ N(0, 1); deterministic synthetic init here.
        self.embedding_table = jax.random.normal(
            key, (num_classes + use_cfg_embedding, hidden_size), dtype=jnp.float32
        )
        self.num_classes = num_classes
        self.dropout_prob = dropout_prob

    def token_drop(self, labels, rng_key=None, force_drop_ids=None):
        if force_drop_ids is None:
            drop_ids = (
                jax.random.uniform(rng_key, (labels.shape[0],)) < self.dropout_prob
            )
        else:
            drop_ids = force_drop_ids == 1
        return jnp.where(drop_ids, self.num_classes, labels)

    def __call__(self, labels, train, rng_key=None, force_drop_ids=None):
        use_dropout = self.dropout_prob > 0
        if (train and use_dropout) or (force_drop_ids is not None):
            labels = self.token_drop(labels, rng_key, force_drop_ids)
        return label_embed_pallas(labels, self.embedding_table)


# --------------------------------- Main ------------------------------------ #
if __name__ == "__main__":
    num_classes = 10
    hidden_size = 128
    dropout_prob = 0.1
    batch = 8

    root = jax.random.PRNGKey(0)
    k_table, k_labels, k_drop = jax.random.split(root, 3)

    embedder = LabelEmbedder(num_classes, hidden_size, dropout_prob, k_table)
    labels = jax.random.randint(k_labels, (batch,), 0, num_classes, dtype=jnp.int32)

    # Eval path (no dropout), with a forced-drop mask exercising the CFG row.
    force_drop_ids = jnp.array([1, 0, 0, 1, 0, 0, 0, 1], dtype=jnp.int32)
    out = embedder(labels, train=False, force_drop_ids=force_drop_ids)
    out = jax.block_until_ready(out)

    # Train-time random-drop path.
    out_train = embedder(labels, train=True, rng_key=k_drop)
    out_train = jax.block_until_ready(out_train)

    # Non-multiple-of-8 batch to exercise the pad/slice path.
    out_small = embedder(labels[:5], train=False)
    out_small = jax.block_until_ready(out_small)

    # Reference checks (plain JAX gather).
    dropped = jnp.where(force_drop_ids == 1, num_classes, labels)
    ref = jnp.take(embedder.embedding_table, dropped, axis=0)
    assert out.shape == (batch, hidden_size)
    assert jnp.allclose(out, ref, atol=1e-6), "mismatch vs reference gather (eval)"

    drop_bits = jax.random.uniform(k_drop, (batch,)) < dropout_prob
    dropped_train = jnp.where(drop_bits, num_classes, labels)
    ref_train = jnp.take(embedder.embedding_table, dropped_train, axis=0)
    assert out_train.shape == (batch, hidden_size)
    assert jnp.allclose(out_train, ref_train, atol=1e-6), "mismatch vs reference (train)"

    ref_small = jnp.take(embedder.embedding_table, labels[:5], axis=0)
    assert out_small.shape == (5, hidden_size)
    assert jnp.allclose(out_small, ref_small, atol=1e-6), "mismatch vs reference (pad path)"

    print("KERNEL_OK")
</pallas_src>

<mosaic_0001>
module attributes {stable_mosaic.version = 11 : i64} {
  func.func @_gather_rows_kernel(%arg0: i32, %arg1: memref<8xi32, #tpu.memory_space<smem>>, %arg2: memref<11x128xf32, #tpu.memory_space<any>>, %arg3: memref<8x128xf32, #tpu.memory_space<vmem>>, %arg4: memref<8x128xf32, #tpu.memory_space<vmem>>, %arg5: memref<8x!tpu.dma_semaphore, #tpu.memory_space<semaphore_mem>>) attributes {dimension_semantics = [#tpu.dimension_semantics<parallel>], iteration_bounds = array<i64: 1>, scalar_prefetch = 1 : i64, scratch_operands = 2 : i64, tpu.core_type = #tpu.core_type<tc>, window_params = [{}, {transform_indices = @transform_1, window_bounds = array<i64: 8, 128>}]} {
    %c8_i32 = arith.constant 8 : i32
    %0 = arith.muli %arg0, %c8_i32 : i32
    %c0_i32 = arith.constant 0 : i32
    %1 = arith.addi %0, %c0_i32 : i32
    %2 = arith.index_cast %1 : i32 to index
    %3 = memref.load %arg1[%2] : memref<8xi32, #tpu.memory_space<smem>>
    %c0_i32_0 = arith.constant 0 : i32
    %c0_i32_1 = arith.constant 0 : i32
    %c0_i32_2 = arith.constant 0 : i32
    %4 = tpu.memref_slice %arg2[%3, %c0_i32_2] : memref<11x128xf32, #tpu.memory_space<any>> -> memref<1x128xf32, #tpu.memory_space<any>>
    %5 = tpu.memref_squeeze %4 : memref<1x128xf32, #tpu.memory_space<any>> -> memref<128xf32, #tpu.memory_space<any>>
    %c0_i32_3 = arith.constant 0 : i32
    %6 = tpu.memref_slice %arg4[%c0_i32_0, %c0_i32_3] : memref<8x128xf32, #tpu.memory_space<vmem>> -> memref<1x128xf32, #tpu.memory_space<vmem>>
    %7 = tpu.memref_squeeze %6 : memref<1x128xf32, #tpu.memory_space<vmem>> -> memref<128xf32, #tpu.memory_space<vmem>>
    %8 = tpu.memref_slice %arg5[%c0_i32_1] : memref<8x!tpu.dma_semaphore, #tpu.memory_space<semaphore_mem>> -> memref<1x!tpu.dma_semaphore, #tpu.memory_space<semaphore_mem>>
    %9 = tpu.memref_squeeze %8 : memref<1x!tpu.dma_semaphore, #tpu.memory_space<semaphore_mem>> -> memref<!tpu.dma_semaphore, #tpu.memory_space<semaphore_mem>>
    tpu.enqueue_dma source(%5 : memref<128xf32, #tpu.memory_space<any>>) target(%7 : memref<128xf32, #tpu.memory_space<vmem>>) target_semaphore(%9 : memref<!tpu.dma_semaphore, #tpu.memory_space<semaphore_mem>>)
    %c1_i32 = arith.constant 1 : i32
    %10 = arith.addi %0, %c1_i32 : i32
    %11 = arith.index_cast %10 : i32 to index
    %12 = memref.load %arg1[%11] : memref<8xi32, #tpu.memory_space<smem>>
    %c1_i32_4 = arith.constant 1 : i32
    %c1_i32_5 = arith.constant 1 : i32
    %c0_i32_6 = arith.constant 0 : i32
    %13 = tpu.memref_slice %arg2[%12, %c0_i32_6] : memref<11x128xf32, #tpu.memory_space<any>> -> memref<1x128xf32, #tpu.memory_space<any>>
    %14 = tpu.memref_squeeze %13 : memref<1x128xf32, #tpu.memory_space<any>> -> memref<128xf32, #tpu.memory_space<any>>
    %c0_i32_7 = arith.constant 0 : i32
    %15 = tpu.memref_slice %arg4[%c1_i32_4, %c0_i32_7] : memref<8x128xf32, #tpu.memory_space<vmem>> -> memref<1x128xf32, #tpu.memory_space<vmem>>
    %16 = tpu.memref_squeeze %15 : memref<1x128xf32, #tpu.memory_space<vmem>> -> memref<128xf32, #tpu.memory_space<vmem>>
    %17 = tpu.memref_slice %arg5[%c1_i32_5] : memref<8x!tpu.dma_semaphore, #tpu.memory_space<semaphore_mem>> -> memref<1x!tpu.dma_semaphore, #tpu.memory_space<semaphore_mem>>
    %18 = tpu.memref_squeeze %17 : memref<1x!tpu.dma_semaphore, #tpu.memory_space<semaphore_mem>> -> memref<!tpu.dma_semaphore, #tpu.memory_space<semaphore_mem>>
    tpu.enqueue_dma source(%14 : memref<128xf32, #tpu.memory_space<any>>) target(%16 : memref<128xf32, #tpu.memory_space<vmem>>) target_semaphore(%18 : memref<!tpu.dma_semaphore, #tpu.memory_space<semaphore_mem>>)
    %c2_i32 = arith.constant 2 : i32
    %19 = arith.addi %0, %c2_i32 : i32
    %20 = arith.index_cast %19 : i32 to index
    %21 = memref.load %arg1[%20] : memref<8xi32, #tpu.memory_space<smem>>
    %c2_i32_8 = arith.constant 2 : i32
    %c2_i32_9 = arith.constant 2 : i32
    %c0_i32_10 = arith.constant 0 : i32
    %22 = tpu.memref_slice %arg2[%21, %c0_i32_10] : memref<11x128xf32, #tpu.memory_space<any>> -> memref<1x128xf32, #tpu.memory_space<any>>
    %23 = tpu.memref_squeeze %22 : memref<1x128xf32, #tpu.memory_space<any>> -> memref<128xf32, #tpu.memory_space<any>>
    %c0_i32_11 = arith.constant 0 : i32
    %24 = tpu.memref_slice %arg4[%c2_i32_8, %c0_i32_11] : memref<8x128xf32, #tpu.memory_space<vmem>> -> memref<1x128xf32, #tpu.memory_space<vmem>>
    %25 = tpu.memref_squeeze %24 : memref<1x128xf32, #tpu.memory_space<vmem>> -> memref<128xf32, #tpu.memory_space<vmem>>
    %26 = tpu.memref_slice %arg5[%c2_i32_9] : memref<8x!tpu.dma_semaphore, #tpu.memory_space<semaphore_mem>> -> memref<1x!tpu.dma_semaphore, #tpu.memory_space<semaphore_mem>>
    %27 = tpu.memref_squeeze %26 : memref<1x!tpu.dma_semaphore, #tpu.memory_space<semaphore_mem>> -> memref<!tpu.dma_semaphore, #tpu.memory_space<semaphore_mem>>
    tpu.enqueue_dma source(%23 : memref<128xf32, #tpu.memory_space<any>>) target(%25 : memref<128xf32, #tpu.memory_space<vmem>>) target_semaphore(%27 : memref<!tpu.dma_semaphore, #tpu.memory_space<semaphore_mem>>)
    %c3_i32 = arith.constant 3 : i32
    %28 = arith.addi %0, %c3_i32 : i32
    %29 = arith.index_cast %28 : i32 to index
    %30 = memref.load %arg1[%29] : memref<8xi32, #tpu.memory_space<smem>>
    %c3_i32_12 = arith.constant 3 : i32
    %c3_i32_13 = arith.constant 3 : i32
    %c0_i32_14 = arith.constant 0 : i32
    %31 = tpu.memref_slice %arg2[%30, %c0_i32_14] : memref<11x128xf32, #tpu.memory_space<any>> -> memref<1x128xf32, #tpu.memory_space<any>>
    %32 = tpu.memref_squeeze %31 : memref<1x128xf32, #tpu.memory_space<any>> -> memref<128xf32, #tpu.memory_space<any>>
    %c0_i32_15 = arith.constant 0 : i32
    %33 = tpu.memref_slice %arg4[%c3_i32_12, %c0_i32_15] : memref<8x128xf32, #tpu.memory_space<vmem>> -> memref<1x128xf32, #tpu.memory_space<vmem>>
    %34 = tpu.memref_squeeze %33 : memref<1x128xf32, #tpu.memory_space<vmem>> -> memref<128xf32, #tpu.memory_space<vmem>>
    %35 = tpu.memref_slice %arg5[%c3_i32_13] : memref<8x!tpu.dma_semaphore, #tpu.memory_space<semaphore_mem>> -> memref<1x!tpu.dma_semaphore, #tpu.memory_space<semaphore_mem>>
    %36 = tpu.memref_squeeze %35 : memref<1x!tpu.dma_semaphore, #tpu.memory_space<semaphore_mem>> -> memref<!tpu.dma_semaphore, #tpu.memory_space<semaphore_mem>>
    tpu.enqueue_dma source(%32 : memref<128xf32, #tpu.memory_space<any>>) target(%34 : memref<128xf32, #tpu.memory_space<vmem>>) target_semaphore(%36 : memref<!tpu.dma_semaphore, #tpu.memory_space<semaphore_mem>>)
    %c4_i32 = arith.constant 4 : i32
    %37 = arith.addi %0, %c4_i32 : i32
    %38 = arith.index_cast %37 : i32 to index
    %39 = memref.load %arg1[%38] : memref<8xi32, #tpu.memory_space<smem>>
    %c4_i32_16 = arith.constant 4 : i32
    %c4_i32_17 = arith.constant 4 : i32
    %c0_i32_18 = arith.constant 0 : i32
    %40 = tpu.memref_slice %arg2[%39, %c0_i32_18] : memref<11x128xf32, #tpu.memory_space<any>> -> memref<1x128xf32, #tpu.memory_space<any>>
    %41 = tpu.memref_squeeze %40 : memref<1x128xf32, #tpu.memory_space<any>> -> memref<128xf32, #tpu.memory_space<any>>
    %c0_i32_19 = arith.constant 0 : i32
    %42 = tpu.memref_slice %arg4[%c4_i32_16, %c0_i32_19] : memref<8x128xf32, #tpu.memory_space<vmem>> -> memref<1x128xf32, #tpu.memory_space<vmem>>
    %43 = tpu.memref_squeeze %42 : memref<1x128xf32, #tpu.memory_space<vmem>> -> memref<128xf32, #tpu.memory_space<vmem>>
    %44 = tpu.memref_slice %arg5[%c4_i32_17] : memref<8x!tpu.dma_semaphore, #tpu.memory_space<semaphore_mem>> -> memref<1x!tpu.dma_semaphore, #tpu.memory_space<semaphore_mem>>
    %45 = tpu.memref_squeeze %44 : memref<1x!tpu.dma_semaphore, #tpu.memory_space<semaphore_mem>> -> memref<!tpu.dma_semaphore, #tpu.memory_space<semaphore_mem>>
    tpu.enqueue_dma source(%41 : memref<128xf32, #tpu.memory_space<any>>) target(%43 : memref<128xf32, #tpu.memory_space<vmem>>) target_semaphore(%45 : memref<!tpu.dma_semaphore, #tpu.memory_space<semaphore_mem>>)
    %c5_i32 = arith.constant 5 : i32
    %46 = arith.addi %0, %c5_i32 : i32
    %47 = arith.index_cast %46 : i32 to index
    %48 = memref.load %arg1[%47] : memref<8xi32, #tpu.memory_space<smem>>
    %c5_i32_20 = arith.constant 5 : i32
    %c5_i32_21 = arith.constant 5 : i32
    %c0_i32_22 = arith.constant 0 : i32
    %49 = tpu.memref_slice %arg2[%48, %c0_i32_22] : memref<11x128xf32, #tpu.memory_space<any>> -> memref<1x128xf32, #tpu.memory_space<any>>
    %50 = tpu.memref_squeeze %49 : memref<1x128xf32, #tpu.memory_space<any>> -> memref<128xf32, #tpu.memory_space<any>>
    %c0_i32_23 = arith.constant 0 : i32
    %51 = tpu.memref_slice %arg4[%c5_i32_20, %c0_i32_23] : memref<8x128xf32, #tpu.memory_space<vmem>> -> memref<1x128xf32, #tpu.memory_space<vmem>>
    %52 = tpu.memref_squeeze %51 : memref<1x128xf32, #tpu.memory_space<vmem>> -> memref<128xf32, #tpu.memory_space<vmem>>
    %53 = tpu.memref_slice %arg5[%c5_i32_21] : memref<8x!tpu.dma_semaphore, #tpu.memory_space<semaphore_mem>> -> memref<1x!tpu.dma_semaphore, #tpu.memory_space<semaphore_mem>>
    %54 = tpu.memref_squeeze %53 : memref<1x!tpu.dma_semaphore, #tpu.memory_space<semaphore_mem>> -> memref<!tpu.dma_semaphore, #tpu.memory_space<semaphore_mem>>
    tpu.enqueue_dma source(%50 : memref<128xf32, #tpu.memory_space<any>>) target(%52 : memref<128xf32, #tpu.memory_space<vmem>>) target_semaphore(%54 : memref<!tpu.dma_semaphore, #tpu.memory_space<semaphore_mem>>)
    %c6_i32 = arith.constant 6 : i32
    %55 = arith.addi %0, %c6_i32 : i32
    %56 = arith.index_cast %55 : i32 to index
    %57 = memref.load %arg1[%56] : memref<8xi32, #tpu.memory_space<smem>>
    %c6_i32_24 = arith.constant 6 : i32
    %c6_i32_25 = arith.constant 6 : i32
    %c0_i32_26 = arith.constant 0 : i32
    %58 = tpu.memref_slice %arg2[%57, %c0_i32_26] : memref<11x128xf32, #tpu.memory_space<any>> -> memref<1x128xf32, #tpu.memory_space<any>>
    %59 = tpu.memref_squeeze %58 : memref<1x128xf32, #tpu.memory_space<any>> -> memref<128xf32, #tpu.memory_space<any>>
    %c0_i32_27 = arith.constant 0 : i32
    %60 = tpu.memref_slice %arg4[%c6_i32_24, %c0_i32_27] : memref<8x128xf32, #tpu.memory_space<vmem>> -> memref<1x128xf32, #tpu.memory_space<vmem>>
    %61 = tpu.memref_squeeze %60 : memref<1x128xf32, #tpu.memory_space<vmem>> -> memref<128xf32, #tpu.memory_space<vmem>>
    %62 = tpu.memref_slice %arg5[%c6_i32_25] : memref<8x!tpu.dma_semaphore, #tpu.memory_space<semaphore_mem>> -> memref<1x!tpu.dma_semaphore, #tpu.memory_space<semaphore_mem>>
    %63 = tpu.memref_squeeze %62 : memref<1x!tpu.dma_semaphore, #tpu.memory_space<semaphore_mem>> -> memref<!tpu.dma_semaphore, #tpu.memory_space<semaphore_mem>>
    tpu.enqueue_dma source(%59 : memref<128xf32, #tpu.memory_space<any>>) target(%61 : memref<128xf32, #tpu.memory_space<vmem>>) target_semaphore(%63 : memref<!tpu.dma_semaphore, #tpu.memory_space<semaphore_mem>>)
    %c7_i32 = arith.constant 7 : i32
    %64 = arith.addi %0, %c7_i32 : i32
    %65 = arith.index_cast %64 : i32 to index
    %66 = memref.load %arg1[%65] : memref<8xi32, #tpu.memory_space<smem>>
    %c7_i32_28 = arith.constant 7 : i32
    %c7_i32_29 = arith.constant 7 : i32
    %c0_i32_30 = arith.constant 0 : i32
    %67 = tpu.memref_slice %arg2[%66, %c0_i32_30] : memref<11x128xf32, #tpu.memory_space<any>> -> memref<1x128xf32, #tpu.memory_space<any>>
    %68 = tpu.memref_squeeze %67 : memref<1x128xf32, #tpu.memory_space<any>> -> memref<128xf32, #tpu.memory_space<any>>
    %c0_i32_31 = arith.constant 0 : i32
    %69 = tpu.memref_slice %arg4[%c7_i32_28, %c0_i32_31] : memref<8x128xf32, #tpu.memory_space<vmem>> -> memref<1x128xf32, #tpu.memory_space<vmem>>
    %70 = tpu.memref_squeeze %69 : memref<1x128xf32, #tpu.memory_space<vmem>> -> memref<128xf32, #tpu.memory_space<vmem>>
    %71 = tpu.memref_slice %arg5[%c7_i32_29] : memref<8x!tpu.dma_semaphore, #tpu.memory_space<semaphore_mem>> -> memref<1x!tpu.dma_semaphore, #tpu.memory_space<semaphore_mem>>
    %72 = tpu.memref_squeeze %71 : memref<1x!tpu.dma_semaphore, #tpu.memory_space<semaphore_mem>> -> memref<!tpu.dma_semaphore, #tpu.memory_space<semaphore_mem>>
    tpu.enqueue_dma source(%68 : memref<128xf32, #tpu.memory_space<any>>) target(%70 : memref<128xf32, #tpu.memory_space<vmem>>) target_semaphore(%72 : memref<!tpu.dma_semaphore, #tpu.memory_space<semaphore_mem>>)
    %c0_i32_32 = arith.constant 0 : i32
    %73 = arith.addi %0, %c0_i32_32 : i32
    %74 = arith.index_cast %73 : i32 to index
    %75 = memref.load %arg1[%74] : memref<8xi32, #tpu.memory_space<smem>>
    %c0_i32_33 = arith.constant 0 : i32
    %c0_i32_34 = arith.constant 0 : i32
    %c0_i32_35 = arith.constant 0 : i32
    %76 = tpu.memref_slice %arg2[%75, %c0_i32_35] : memref<11x128xf32, #tpu.memory_space<any>> -> memref<1x128xf32, #tpu.memory_space<any>>
    %77 = tpu.memref_squeeze %76 : memref<1x128xf32, #tpu.memory_space<any>> -> memref<128xf32, #tpu.memory_space<any>>
    %c0_i32_36 = arith.constant 0 : i32
    %78 = tpu.memref_slice %arg4[%c0_i32_33, %c0_i32_36] : memref<8x128xf32, #tpu.memory_space<vmem>> -> memref<1x128xf32, #tpu.memory_space<vmem>>
    %79 = tpu.memref_squeeze %78 : memref<1x128xf32, #tpu.memory_space<vmem>> -> memref<128xf32, #tpu.memory_space<vmem>>
    %80 = tpu.memref_slice %arg5[%c0_i32_34] : memref<8x!tpu.dma_semaphore, #tpu.memory_space<semaphore_mem>> -> memref<1x!tpu.dma_semaphore, #tpu.memory_space<semaphore_mem>>
    %81 = tpu.memref_squeeze %80 : memref<1x!tpu.dma_semaphore, #tpu.memory_space<semaphore_mem>> -> memref<!tpu.dma_semaphore, #tpu.memory_space<semaphore_mem>>
    tpu.wait_dma2 semaphore(%81 : memref<!tpu.dma_semaphore, #tpu.memory_space<semaphore_mem>>) src(%77 : memref<128xf32, #tpu.memory_space<any>>) dst(%79 : memref<128xf32, #tpu.memory_space<vmem>>)
    %c1_i32_37 = arith.constant 1 : i32
    %82 = arith.addi %0, %c1_i32_37 : i32
    %83 = arith.index_cast %82 : i32 to index
    %84 = memref.load %arg1[%83] : memref<8xi32, #tpu.memory_space<smem>>
    %c1_i32_38 = arith.constant 1 : i32
    %c1_i32_39 = arith.constant 1 : i32
    %c0_i32_40 = arith.constant 0 : i32
    %85 = tpu.memref_slice %arg2[%84, %c0_i32_40] : memref<11x128xf32, #tpu.memory_space<any>> -> memref<1x128xf32, #tpu.memory_space<any>>
    %86 = tpu.memref_squeeze %85 : memref<1x128xf32, #tpu.memory_space<any>> -> memref<128xf32, #tpu.memory_space<any>>
    %c0_i32_41 = arith.constant 0 : i32
    %87 = tpu.memref_slice %arg4[%c1_i32_38, %c0_i32_41] : memref<8x128xf32, #tpu.memory_space<vmem>> -> memref<1x128xf32, #tpu.memory_space<vmem>>
    %88 = tpu.memref_squeeze %87 : memref<1x128xf32, #tpu.memory_space<vmem>> -> memref<128xf32, #tpu.memory_space<vmem>>
    %89 = tpu.memref_slice %arg5[%c1_i32_39] : memref<8x!tpu.dma_semaphore, #tpu.memory_space<semaphore_mem>> -> memref<1x!tpu.dma_semaphore, #tpu.memory_space<semaphore_mem>>
    %90 = tpu.memref_squeeze %89 : memref<1x!tpu.dma_semaphore, #tpu.memory_space<semaphore_mem>> -> memref<!tpu.dma_semaphore, #tpu.memory_space<semaphore_mem>>
    tpu.wait_dma2 semaphore(%90 : memref<!tpu.dma_semaphore, #tpu.memory_space<semaphore_mem>>) src(%86 : memref<128xf32, #tpu.memory_space<any>>) dst(%88 : memref<128xf32, #tpu.memory_space<vmem>>)
    %c2_i32_42 = arith.constant 2 : i32
    %91 = arith.addi %0, %c2_i32_42 : i32
    %92 = arith.index_cast %91 : i32 to index
    %93 = memref.load %arg1[%92] : memref<8xi32, #tpu.memory_space<smem>>
    %c2_i32_43 = arith.constant 2 : i32
    %c2_i32_44 = arith.constant 2 : i32
    %c0_i32_45 = arith.constant 0 : i32
    %94 = tpu.memref_slice %arg2[%93, %c0_i32_45] : memref<11x128xf32, #tpu.memory_space<any>> -> memref<1x128xf32, #tpu.memory_space<any>>
    %95 = tpu.memref_squeeze %94 : memref<1x128xf32, #tpu.memory_space<any>> -> memref<128xf32, #tpu.memory_space<any>>
    %c0_i32_46 = arith.constant 0 : i32
    %96 = tpu.memref_slice %arg4[%c2_i32_43, %c0_i32_46] : memref<8x128xf32, #tpu.memory_space<vmem>> -> memref<1x128xf32, #tpu.memory_space<vmem>>
    %97 = tpu.memref_squeeze %96 : memref<1x128xf32, #tpu.memory_space<vmem>> -> memref<128xf32, #tpu.memory_space<vmem>>
    %98 = tpu.memref_slice %arg5[%c2_i32_44] : memref<8x!tpu.dma_semaphore, #tpu.memory_space<semaphore_mem>> -> memref<1x!tpu.dma_semaphore, #tpu.memory_space<semaphore_mem>>
    %99 = tpu.memref_squeeze %98 : memref<1x!tpu.dma_semaphore, #tpu.memory_space<semaphore_mem>> -> memref<!tpu.dma_semaphore, #tpu.memory_space<semaphore_mem>>
    tpu.wait_dma2 semaphore(%99 : memref<!tpu.dma_semaphore, #tpu.memory_space<semaphore_mem>>) src(%95 : memref<128xf32, #tpu.memory_space<any>>) dst(%97 : memref<128xf32, #tpu.memory_space<vmem>>)
    %c3_i32_47 = arith.constant 3 : i32
    %100 = arith.addi %0, %c3_i32_47 : i32
    %101 = arith.index_cast %100 : i32 to index
    %102 = memref.load %arg1[%101] : memref<8xi32, #tpu.memory_space<smem>>
    %c3_i32_48 = arith.constant 3 : i32
    %c3_i32_49 = arith.constant 3 : i32
    %c0_i32_50 = arith.constant 0 : i32
    %103 = tpu.memref_slice %arg2[%102, %c0_i32_50] : memref<11x128xf32, #tpu.memory_space<any>> -> memref<1x128xf32, #tpu.memory_space<any>>
    %104 = tpu.memref_squeeze %103 : memref<1x128xf32, #tpu.memory_space<any>> -> memref<128xf32, #tpu.memory_space<any>>
    %c0_i32_51 = arith.constant 0 : i32
    %105 = tpu.memref_slice %arg4[%c3_i32_48, %c0_i32_51] : memref<8x128xf32, #tpu.memory_space<vmem>> -> memref<1x128xf32, #tpu.memory_space<vmem>>
    %106 = tpu.memref_squeeze %105 : memref<1x128xf32, #tpu.memory_space<vmem>> -> memref<128xf32, #tpu.memory_space<vmem>>
    %107 = tpu.memref_slice %arg5[%c3_i32_49] : memref<8x!tpu.dma_semaphore, #tpu.memory_space<semaphore_mem>> -> memref<1x!tpu.dma_semaphore, #tpu.memory_space<semaphore_mem>>
    %108 = tpu.memref_squeeze %107 : memref<1x!tpu.dma_semaphore, #tpu.memory_space<semaphore_mem>> -> memref<!tpu.dma_semaphore, #tpu.memory_space<semaphore_mem>>
    tpu.wait_dma2 semaphore(%108 : memref<!tpu.dma_semaphore, #tpu.memory_space<semaphore_mem>>) src(%104 : memref<128xf32, #tpu.memory_space<any>>) dst(%106 : memref<128xf32, #tpu.memory_space<vmem>>)
    %c4_i32_52 = arith.constant 4 : i32
    %109 = arith.addi %0, %c4_i32_52 : i32
    %110 = arith.index_cast %109 : i32 to index
    %111 = memref.load %arg1[%110] : memref<8xi32, #tpu.memory_space<smem>>
    %c4_i32_53 = arith.constant 4 : i32
    %c4_i32_54 = arith.constant 4 : i32
    %c0_i32_55 = arith.constant 0 : i32
    %112 = tpu.memref_slice %arg2[%111, %c0_i32_55] : memref<11x128xf32, #tpu.memory_space<any>> -> memref<1x128xf32, #tpu.memory_space<any>>
    %113 = tpu.memref_squeeze %112 : memref<1x128xf32, #tpu.memory_space<any>> -> memref<128xf32, #tpu.memory_space<any>>
    %c0_i32_56 = arith.constant 0 : i32
    %114 = tpu.memref_slice %arg4[%c4_i32_53, %c0_i32_56] : memref<8x128xf32, #tpu.memory_space<vmem>> -> memref<1x128xf32, #tpu.memory_space<vmem>>
    %115 = tpu.memref_squeeze %114 : memref<1x128xf32, #tpu.memory_space<vmem>> -> memref<128xf32, #tpu.memory_space<vmem>>
    %116 = tpu.memref_slice %arg5[%c4_i32_54] : memref<8x!tpu.dma_semaphore, #tpu.memory_space<semaphore_mem>> -> memref<1x!tpu.dma_semaphore, #tpu.memory_space<semaphore_mem>>
    %117 = tpu.memref_squeeze %116 : memref<1x!tpu.dma_semaphore, #tpu.memory_space<semaphore_mem>> -> memref<!tpu.dma_semaphore, #tpu.memory_space<semaphore_mem>>
    tpu.wait_dma2 semaphore(%117 : memref<!tpu.dma_semaphore, #tpu.memory_space<semaphore_mem>>) src(%113 : memref<128xf32, #tpu.memory_space<any>>) dst(%115 : memref<128xf32, #tpu.memory_space<vmem>>)
    %c5_i32_57 = arith.constant 5 : i32
    %118 = arith.addi %0, %c5_i32_57 : i32
    %119 = arith.index_cast %118 : i32 to index
    %120 = memref.load %arg1[%119] : memref<8xi32, #tpu.memory_space<smem>>
    %c5_i32_58 = arith.constant 5 : i32
    %c5_i32_59 = arith.constant 5 : i32
    %c0_i32_60 = arith.constant 0 : i32
    %121 = tpu.memref_slice %arg2[%120, %c0_i32_60] : memref<11x128xf32, #tpu.memory_space<any>> -> memref<1x128xf32, #tpu.memory_space<any>>
    %122 = tpu.memref_squeeze %121 : memref<1x128xf32, #tpu.memory_space<any>> -> memref<128xf32, #tpu.memory_space<any>>
    %c0_i32_61 = arith.constant 0 : i32
    %123 = tpu.memref_slice %arg4[%c5_i32_58, %c0_i32_61] : memref<8x128xf32, #tpu.memory_space<vmem>> -> memref<1x128xf32, #tpu.memory_space<vmem>>
    %124 = tpu.memref_squeeze %123 : memref<1x128xf32, #tpu.memory_space<vmem>> -> memref<128xf32, #tpu.memory_space<vmem>>
    %125 = tpu.memref_slice %arg5[%c5_i32_59] : memref<8x!tpu.dma_semaphore, #tpu.memory_space<semaphore_mem>> -> memref<1x!tpu.dma_semaphore, #tpu.memory_space<semaphore_mem>>
    %126 = tpu.memref_squeeze %125 : memref<1x!tpu.dma_semaphore, #tpu.memory_space<semaphore_mem>> -> memref<!tpu.dma_semaphore, #tpu.memory_space<semaphore_mem>>
    tpu.wait_dma2 semaphore(%126 : memref<!tpu.dma_semaphore, #tpu.memory_space<semaphore_mem>>) src(%122 : memref<128xf32, #tpu.memory_space<any>>) dst(%124 : memref<128xf32, #tpu.memory_space<vmem>>)
    %c6_i32_62 = arith.constant 6 : i32
    %127 = arith.addi %0, %c6_i32_62 : i32
    %128 = arith.index_cast %127 : i32 to index
    %129 = memref.load %arg1[%128] : memref<8xi32, #tpu.memory_space<smem>>
    %c6_i32_63 = arith.constant 6 : i32
    %c6_i32_64 = arith.constant 6 : i32
    %c0_i32_65 = arith.constant 0 : i32
    %130 = tpu.memref_slice %arg2[%129, %c0_i32_65] : memref<11x128xf32, #tpu.memory_space<any>> -> memref<1x128xf32, #tpu.memory_space<any>>
    %131 = tpu.memref_squeeze %130 : memref<1x128xf32, #tpu.memory_space<any>> -> memref<128xf32, #tpu.memory_space<any>>
    %c0_i32_66 = arith.constant 0 : i32
    %132 = tpu.memref_slice %arg4[%c6_i32_63, %c0_i32_66] : memref<8x128xf32, #tpu.memory_space<vmem>> -> memref<1x128xf32, #tpu.memory_space<vmem>>
    %133 = tpu.memref_squeeze %132 : memref<1x128xf32, #tpu.memory_space<vmem>> -> memref<128xf32, #tpu.memory_space<vmem>>
    %134 = tpu.memref_slice %arg5[%c6_i32_64] : memref<8x!tpu.dma_semaphore, #tpu.memory_space<semaphore_mem>> -> memref<1x!tpu.dma_semaphore, #tpu.memory_space<semaphore_mem>>
    %135 = tpu.memref_squeeze %134 : memref<1x!tpu.dma_semaphore, #tpu.memory_space<semaphore_mem>> -> memref<!tpu.dma_semaphore, #tpu.memory_space<semaphore_mem>>
    tpu.wait_dma2 semaphore(%135 : memref<!tpu.dma_semaphore, #tpu.memory_space<semaphore_mem>>) src(%131 : memref<128xf32, #tpu.memory_space<any>>) dst(%133 : memref<128xf32, #tpu.memory_space<vmem>>)
    %c7_i32_67 = arith.constant 7 : i32
    %136 = arith.addi %0, %c7_i32_67 : i32
    %137 = arith.index_cast %136 : i32 to index
    %138 = memref.load %arg1[%137] : memref<8xi32, #tpu.memory_space<smem>>
    %c7_i32_68 = arith.constant 7 : i32
    %c7_i32_69 = arith.constant 7 : i32
    %c0_i32_70 = arith.constant 0 : i32
    %139 = tpu.memref_slice %arg2[%138, %c0_i32_70] : memref<11x128xf32, #tpu.memory_space<any>> -> memref<1x128xf32, #tpu.memory_space<any>>
    %140 = tpu.memref_squeeze %139 : memref<1x128xf32, #tpu.memory_space<any>> -> memref<128xf32, #tpu.memory_space<any>>
    %c0_i32_71 = arith.constant 0 : i32
    %141 = tpu.memref_slice %arg4[%c7_i32_68, %c0_i32_71] : memref<8x128xf32, #tpu.memory_space<vmem>> -> memref<1x128xf32, #tpu.memory_space<vmem>>
    %142 = tpu.memref_squeeze %141 : memref<1x128xf32, #tpu.memory_space<vmem>> -> memref<128xf32, #tpu.memory_space<vmem>>
    %143 = tpu.memref_slice %arg5[%c7_i32_69] : memref<8x!tpu.dma_semaphore, #tpu.memory_space<semaphore_mem>> -> memref<1x!tpu.dma_semaphore, #tpu.memory_space<semaphore_mem>>
    %144 = tpu.memref_squeeze %143 : memref<1x!tpu.dma_semaphore, #tpu.memory_space<semaphore_mem>> -> memref<!tpu.dma_semaphore, #tpu.memory_space<semaphore_mem>>
    tpu.wait_dma2 semaphore(%144 : memref<!tpu.dma_semaphore, #tpu.memory_space<semaphore_mem>>) src(%140 : memref<128xf32, #tpu.memory_space<any>>) dst(%142 : memref<128xf32, #tpu.memory_space<vmem>>)
    %c0 = arith.constant 0 : index
    %c0_72 = arith.constant 0 : index
    %145 = vector.load %arg4[%c0, %c0_72] : memref<8x128xf32, #tpu.memory_space<vmem>>, vector<8x128xf32>
    %c0_73 = arith.constant 0 : index
    %c0_74 = arith.constant 0 : index
    %146 = vector.load %arg3[%c0_73, %c0_74] : memref<8x128xf32, #tpu.memory_space<vmem>>, vector<8x128xf32>
    tpu.vector_store %arg3[%c0_73, %c0_74], %145 {strides = array<i32>} : memref<8x128xf32, #tpu.memory_space<vmem>>, vector<8x128xf32>,
    return
  }
  func.func @transform_1(%arg0: i32, %arg1: memref<8xi32, #tpu.memory_space<smem>>) -> (i32, i32) {
    %c0_i32 = arith.constant 0 : i32
    %c0_i32_0 = arith.constant 0 : i32
    return %arg0, %c0_i32 : i32, i32
  }
}

</mosaic_0001>

<llo_original>
// kernel: label_embed_pallas.1
$region0: #{label_embed_pallas.1}
  #allocation0 [shape = 'u32[]', space=smem, size = 0x4, offset = 0x4, fixed_abs, tag = 'smem constant byte address 0x4 - core index']
  #allocation1 [shape = 'u32[144,128]{1,0:T(1,128)}', space=vmem, size = 0x12000, scoped, tag = 'internal scratch']
  #allocation2 [shape = 'f32[8,128]{1,0:T(8,128)}', space=vmem, size = 0x1000, scoped, tag = 'scratch operand']
  #allocation3 [shape = 's32[8]{0}', space=sflag, size = 0x20, scoped, tag = 'scratch operand']
  #allocation4 [shape = 's32[1]{0}', space=sflag, size = 0x4, scoped, tag = 'scoped memory for label_embed_pallas.1']
  #allocation5 [shape = 'u8[512]{0}', space=smem, size = 0x200, scoped, tag = 'prefetched SMEM operand 0']
  #allocation8 [shape = 's32[]', space=sflag, size = 0x4, offset = 0, fixed_abs, tag = 'sflag constant byte address 0x0 - dummy sync flag']
  #allocation9 [shape = 's32[]', space=sflag, size = 0x4, offset = 0, fixed_abs, tag = 'sflag constant byte address 0x0 - dummy sync flag']
  #allocation10 [shape = 'u32[]', space=smem, size = 0x4, offset = 0x44, fixed_abs, tag = 'smem constant byte address 0x44 - assertion arg 0']
  #allocation11 [shape = 'u32[]', space=smem, size = 0x4, offset = 0x48, fixed_abs, tag = 'smem constant byte address 0x48 - assertion arg 1']
  #allocation12 [shape = 's32[]', space=sflag, size = 0x4, offset = 0, fixed_abs, tag = 'sflag constant byte address 0x0 - dummy sync flag']
  #allocation13 [shape = 's32[]', space=sflag, size = 0x4, offset = 0, fixed_abs, tag = 'sflag constant byte address 0x0 - dummy sync flag']
  #allocation14 [shape = 's32[]', space=sflag, size = 0x4, offset = 0, fixed_abs, tag = 'sflag constant byte address 0x0 - dummy sync flag']
  #allocation15 [shape = 's32[]', space=sflag, size = 0x4, offset = 0, fixed_abs, tag = 'sflag constant byte address 0x0 - dummy sync flag']
  #allocation16 [shape = 's32[]', space=sflag, size = 0x4, offset = 0, fixed_abs, tag = 'sflag constant byte address 0x0 - dummy sync flag']
  #allocation17 [shape = 's32[]', space=sflag, size = 0x4, offset = 0, fixed_abs, tag = 'sflag constant byte address 0x0 - dummy sync flag']
  #allocation18 [shape = 's32[]', space=sflag, size = 0x4, offset = 0, fixed_abs, tag = 'sflag constant byte address 0x0 - dummy sync flag']
  #allocation19 [shape = 's32[]', space=sflag, size = 0x4, offset = 0, fixed_abs, tag = 'sflag constant byte address 0x0 - dummy sync flag']
  #allocation20 [shape = 's32[]', space=sflag, size = 0x4, offset = 0, fixed_abs, tag = 'sflag constant byte address 0x0 - dummy sync flag']
  #allocation21 [shape = 's32[]', space=sflag, size = 0x4, offset = 0, fixed_abs, tag = 'sflag constant byte address 0x0 - dummy sync flag']
  #allocation22 [shape = 's32[]', space=sflag, size = 0x4, offset = 0, fixed_abs, tag = 'sflag constant byte address 0x0 - dummy sync flag']
  #allocation23 [shape = 's32[]', space=sflag, size = 0x4, offset = 0, fixed_abs, tag = 'sflag constant byte address 0x0 - dummy sync flag']
  #allocation24 [shape = 's32[]', space=sflag, size = 0x4, offset = 0, fixed_abs, tag = 'sflag constant byte address 0x0 - dummy sync flag']
  #allocation25 [shape = 's32[]', space=sflag, size = 0x4, offset = 0, fixed_abs, tag = 'sflag constant byte address 0x0 - dummy sync flag']
  %s0 = inlined_call_operand.vmem [shape: s32[8], index: 0, kind: input, shape index: {}]
  %s1 = inlined_call_operand.hbm [shape: f32[11,128], index: 1, kind: input, shape index: {}]
  %s2 = inlined_call_operand.hbm [shape: f32[8,128], index: 2, kind: output, shape index: {}]
  %s3 = sld [smem:[#allocation0]]
  $region42: #{label_embed_pallas.1} parent=0
    _
  %s5 = ssub.s32 1, %s3
  %s6 = scalar_select 0, %s5, %s3
  %s7 = sshll.u32 %s0, 4
  %s8 = int_to_ptr.vmem [resolvable:$true] %s7
  %10 = dma.vmem_to_smem %s8, 16, [#allocation5], [#allocation4]
  %11 = dma.done [#allocation4], 16
  %12 = sfence
  $region1: #{label_embed_pallas.1} parent=0
    #allocation6 [shape = 'u8[4096]{0}', space=vmem, size = 0x1000, scoped, tag = 'output window, operand 0, single buffered']
    #allocation7 [shape = 's32[1]{0}', space=sflag, size = 0x4, scoped, tag = 'scoped memory for label_embed_pallas.1']
    %13 = vsyncpa [#allocation7], 0
    %s14 = smul.u32 0, 8
    %s15 = sld [smem:[#allocation5 + %s14]]
    %s16 = smul.addr %s15, 16
    %s17 = scalar_lea.hbm %s1, %s16
    // Predicated region
    $region2: #{label_embed_pallas.1} parent=1 // pred_check
      _
    $region3: #{label_embed_pallas.1} parent=1 // pred_check_branch
      %19 = sbr.rel target = $region5
    $region4: #{label_embed_pallas.1} parent=1 // pred_region
      %20 = sst [smem:[#allocation10]] [#allocation9]
      %21 = sst [smem:[#allocation11]] [#allocation8]
    $region5: #{label_embed_pallas.1} parent=1 // pred_fallthru
      _
    %23 = shalt.err (0)
    %s25 = sshll.u32 [#allocation2], 4
    %s26 = int_to_ptr.vmem [resolvable:$true] %s25
    %28 = dma.hbm_to_vmem [thread:$0]  %s17, 16, %s26, [#allocation3]
    %s29 = sadd.s32 %s14, 1
    %s30 = sld [smem:[#allocation5 + %s29]]
    %s31 = smul.addr %s30, 16
    %s32 = scalar_lea.hbm %s1, %s31
    %s33 = scalar_lea.vmem [#allocation2], 1
    %s34 = scalar_lea.sflag [#allocation3], 1
    // Predicated region
    $region6: #{label_embed_pallas.1} parent=1 // pred_check
      _
    $region7: #{label_embed_pallas.1} parent=1 // pred_check_branch
      %36 = sbr.rel target = $region9
    $region8: #{label_embed_pallas.1} parent=1 // pred_region
      %37 = sst [smem:[#allocation10]] [#allocation13]
      %38 = sst [smem:[#allocation11]] [#allocation12]
    $region9: #{label_embed_pallas.1} parent=1 // pred_fallthru
      _
    %40 = shalt.err (0)
    %s42 = sshll.u32 %s33, 4
    %s43 = int_to_ptr.vmem [resolvable:$true] %s42
    %45 = dma.hbm_to_vmem [thread:$0]  %s32, 16, %s43, %s34
    %s46 = sadd.s32 %s14, 2
    %s47 = sld [smem:[#allocation5 + %s46]]
    %s48 = smul.addr %s47, 16
    %s49 = scalar_lea.hbm %s1, %s48
    %s50 = scalar_lea.vmem [#allocation2], 2
    %s51 = scalar_lea.sflag [#allocation3], 2
    // Predicated region
    $region10: #{label_embed_pallas.1} parent=1 // pred_check
      _
    $region11: #{label_embed_pallas.1} parent=1 // pred_check_branch
      %53 = sbr.rel target = $region13
    $region12: #{label_embed_pallas.1} parent=1 // pred_region
      %54 = sst [smem:[#allocation10]] [#allocation15]
      %55 = sst [smem:[#allocation11]] [#allocation14]
    $region13: #{label_embed_pallas.1} parent=1 // pred_fallthru
      _
    %57 = shalt.err (0)
    %s59 = sshll.u32 %s50, 4
    %s60 = int_to_ptr.vmem [resolvable:$true] %s59
    %62 = dma.hbm_to_vmem [thread:$0]  %s49, 16, %s60, %s51
    %s63 = sadd.s32 %s14, 3
    %s64 = sld [smem:[#allocation5 + %s63]]
    %s65 = smul.addr %s64, 16
    %s66 = scalar_lea.hbm %s1, %s65
    %s67 = scalar_lea.vmem [#allocation2], 3
    %s68 = scalar_lea.sflag [#allocation3], 3
    // Predicated region
    $region14: #{label_embed_pallas.1} parent=1 // pred_check
      _
    $region15: #{label_embed_pallas.1} parent=1 // pred_check_branch
      %70 = sbr.rel target = $region17
    $region16: #{label_embed_pallas.1} parent=1 // pred_region
      %71 = sst [smem:[#allocation10]] [#allocation17]
      %72 = sst [smem:[#allocation11]] [#allocation16]
    $region17: #{label_embed_pallas.1} parent=1 // pred_fallthru
      _
    %74 = shalt.err (0)
    %s76 = sshll.u32 %s67, 4
    %s77 = int_to_ptr.vmem [resolvable:$true] %s76
    %79 = dma.hbm_to_vmem [thread:$0]  %s66, 16, %s77, %s68
    %s80 = sadd.s32 %s14, 4
    %s81 = sld [smem:[#allocation5 + %s80]]
    %s82 = smul.addr %s81, 16
    %s83 = scalar_lea.hbm %s1, %s82
    %s84 = scalar_lea.vmem [#allocation2], 4
    %s85 = scalar_lea.sflag [#allocation3], 4
    // Predicated region
    $region18: #{label_embed_pallas.1} parent=1 // pred_check
      _
    $region19: #{label_embed_pallas.1} parent=1 // pred_check_branch
      %87 = sbr.rel target = $region21
    $region20: #{label_embed_pallas.1} parent=1 // pred_region
      %88 = sst [smem:[#allocation10]] [#allocation19]
      %89 = sst [smem:[#allocation11]] [#allocation18]
    $region21: #{label_embed_pallas.1} parent=1 // pred_fallthru
      _
    %91 = shalt.err (0)
    %s93 = sshll.u32 %s84, 4
    %s94 = int_to_ptr.vmem [resolvable:$true] %s93
    %96 = dma.hbm_to_vmem [thread:$0]  %s83, 16, %s94, %s85
    %s97 = sadd.s32 %s14, 5
    %s98 = sld [smem:[#allocation5 + %s97]]
    %s99 = smul.addr %s98, 16
    %s100 = scalar_lea.hbm %s1, %s99
    %s101 = scalar_lea.vmem [#allocation2], 5
    %s102 = scalar_lea.sflag [#allocation3], 5
    // Predicated region
    $region22: #{label_embed_pallas.1} parent=1 // pred_check
      _
    $region23: #{label_embed_pallas.1} parent=1 // pred_check_branch
      %104 = sbr.rel target = $region25
    $region24: #{label_embed_pallas.1} parent=1 // pred_region
      %105 = sst [smem:[#allocation10]] [#allocation21]
      %106 = sst [smem:[#allocation11]] [#allocation20]
    $region25: #{label_embed_pallas.1} parent=1 // pred_fallthru
      _
    %108 = shalt.err (0)
    %s110 = sshll.u32 %s101, 4
    %s111 = int_to_ptr.vmem [resolvable:$true] %s110
    %113 = dma.hbm_to_vmem [thread:$0]  %s100, 16, %s111, %s102
    %s114 = sadd.s32 %s14, 6
    %s115 = sld [smem:[#allocation5 + %s114]]
    %s116 = smul.addr %s115, 16
    %s117 = scalar_lea.hbm %s1, %s116
    %s118 = scalar_lea.vmem [#allocation2], 6
    %s119 = scalar_lea.sflag [#allocation3], 6
    // Predicated region
    $region26: #{label_embed_pallas.1} parent=1 // pred_check
      _
    $region27: #{label_embed_pallas.1} parent=1 // pred_check_branch
      %121 = sbr.rel target = $region29
    $region28: #{label_embed_pallas.1} parent=1 // pred_region
      %122 = sst [smem:[#allocation10]] [#allocation23]
      %123 = sst [smem:[#allocation11]] [#allocation22]
    $region29: #{label_embed_pallas.1} parent=1 // pred_fallthru
      _
    %125 = shalt.err (0)
    %s127 = sshll.u32 %s118, 4
    %s128 = int_to_ptr.vmem [resolvable:$true] %s127
    %130 = dma.hbm_to_vmem [thread:$0]  %s117, 16, %s128, %s119
    %s131 = sadd.s32 %s14, 7
    %s132 = sld [smem:[#allocation5 + %s131]]
    %s133 = smul.addr %s132, 16
    %s134 = scalar_lea.hbm %s1, %s133
    %s135 = scalar_lea.vmem [#allocation2], 7
    %s136 = scalar_lea.sflag [#allocation3], 7
    // Predicated region
    $region30: #{label_embed_pallas.1} parent=1 // pred_check
      _
    $region31: #{label_embed_pallas.1} parent=1 // pred_check_branch
      %138 = sbr.rel target = $region33
    $region32: #{label_embed_pallas.1} parent=1 // pred_region
      %139 = sst [smem:[#allocation10]] [#allocation25]
      %140 = sst [smem:[#allocation11]] [#allocation24]
    $region33: #{label_embed_pallas.1} parent=1 // pred_fallthru
      _
    %142 = shalt.err (0)
    %s144 = sshll.u32 %s135, 4
    %s145 = int_to_ptr.vmem [resolvable:$true] %s144
    %147 = dma.hbm_to_vmem [thread:$0]  %s134, 16, %s145, %s136
    %s148 = sld [smem:[#allocation5 + %s14]]
    %150 = dma.done [#allocation3], 16
    %s151 = sld [smem:[#allocation5 + %s29]]
    %153 = dma.done %s34, 16
    %s154 = sld [smem:[#allocation5 + %s46]]
    %156 = dma.done %s51, 16
    %s157 = sld [smem:[#allocation5 + %s63]]
    %159 = dma.done %s68, 16
    %s160 = sld [smem:[#allocation5 + %s80]]
    %162 = dma.done %s85, 16
    %s163 = sld [smem:[#allocation5 + %s97]]
    %165 = dma.done %s102, 16
    %s166 = sld [smem:[#allocation5 + %s114]]
    %168 = dma.done %s119, 16
    %s169 = sld [smem:[#allocation5 + %s131]]
    %171 = dma.done %s136, 16
    %v172 = vld [vmem:[#allocation2] sm:$0xff]
    %173 = vst [vmem:[#allocation6] sm:$0xff] %v172
    // Predicated region
    $region34: #{label_embed_pallas.1} parent=1 // pred_check
      _
    $region35: #{label_embed_pallas.1} parent=1 // pred_check_branch
      %175 = sbr.rel (0) target = $region37
    $region36: #{label_embed_pallas.1} parent=1 // pred_region
      %s177 = ssub.s32 128, 128
      %178 = vsyncadd [#allocation7], %s177
      %s180 = sshll.u32 [#allocation6], 4
      %s181 = int_to_ptr.vmem [resolvable:$true] %s180
      %183 = dma.vmem_to_hbm [thread:$0]  %s181, 128, %s2, [#allocation7]
    $region37: #{label_embed_pallas.1} parent=1 // pred_fallthru
      _
    // Predicated region
    $region38: #{label_embed_pallas.1} parent=1 // pred_check
      _
    $region39: #{label_embed_pallas.1} parent=1 // pred_check_branch
      %185 = sbr.rel (0) target = $region41
    $region40: #{label_embed_pallas.1} parent=1 // pred_region
      %186 = dma.done [#allocation7], 128
    $region41: #{label_embed_pallas.1} parent=1 // pred_fallthru
      _
    %187 = vsyncpa [#allocation7], 1
  %188 = vsyncmov [#allocation3]
  %s189 = vpop.sfrf %188
  %p190 = scmp.eq.s32.totalorder %s189, 0
  %p191 = pneg %p190
  %193 = shalt.err (%p191)
  %s194 = scalar_lea.sflag [#allocation3], 1
  %195 = vsyncmov %s194
  %s196 = vpop.sfrf %195
  %p197 = scmp.eq.s32.totalorder %s196, 0
  %p198 = pneg %p197
  %200 = shalt.err (%p198)
  %s201 = scalar_lea.sflag [#allocation3], 2
  %202 = vsyncmov %s201
  %s203 = vpop.sfrf %202
  %p204 = scmp.eq.s32.totalorder %s203, 0
  %p205 = pneg %p204
  %207 = shalt.err (%p205)
  %s208 = scalar_lea.sflag [#allocation3], 3
  %209 = vsyncmov %s208
  %s210 = vpop.sfrf %209
  %p211 = scmp.eq.s32.totalorder %s210, 0
  %p212 = pneg %p211
  %214 = shalt.err (%p212)
  %s215 = scalar_lea.sflag [#allocation3], 4
  %216 = vsyncmov %s215
  %s217 = vpop.sfrf %216
  %p218 = scmp.eq.s32.totalorder %s217, 0
  %p219 = pneg %p218
  %221 = shalt.err (%p219)
  %s222 = scalar_lea.sflag [#allocation3], 5
  %223 = vsyncmov %s222
  %s224 = vpop.sfrf %223
  %p225 = scmp.eq.s32.totalorder %s224, 0
  %p226 = pneg %p225
  %228 = shalt.err (%p226)
  %s229 = scalar_lea.sflag [#allocation3], 6
  %230 = vsyncmov %s229
  %s231 = vpop.sfrf %230
  %p232 = scmp.eq.s32.totalorder %s231, 0
  %p233 = pneg %p232
  %235 = shalt.err (%p233)
  %s236 = scalar_lea.sflag [#allocation3], 7
  %237 = vsyncmov %s236
  %s238 = vpop.sfrf %237
  %p239 = scmp.eq.s32.totalorder %s238, 0
  %p240 = pneg %p239
  %242 = shalt.err (%p240)

</llo_original>
